<compile_context>
chip_gen: v7x
topology: tpu7x:2x2x1
jax: 0.10.0
libtpu: 0.0.40
codegen_flags: <defaults>
</compile_context>

<pallas_src>
import functools

import jax
import jax.numpy as jnp
from jax.experimental import pallas as pl
from jax.experimental.pallas import tpu as pltpu


# ------------------------------------------------------------------ kernels --

def _mlp1_kernel(x_ref, w1_ref, b1_ref, h_ref):
    """h = tanh(x @ w1 + b1)  (first Linear + activation, computed once)."""
    x = x_ref[...]                                    # [T, H]  bf16
    w1 = w1_ref[...]                                  # [H, I]  bf16
    b1 = b1_ref[...].astype(jnp.float32)              # [1, I]
    h = jnp.dot(x, w1, preferred_element_type=jnp.float32) + b1   # MXU, f32 acc
    h_ref[...] = jnp.tanh(h).astype(h_ref.dtype)      # EUP tanh, bf16 store


def _mlp2_kernel(h_ref, w2_ref, b2_ref, o_ref, *, heads_per_tile, head_dim):
    """One (layer, k/v, head-group) tile: o = h @ w2_tile + b2_tile.

    The output block is [1, heads_per_tile, T, head_dim]; the per-head stores
    realize the (T, head) <-> (head, T) permute for free via the out BlockSpec
    (no XLA transpose pass afterwards).
    """
    h = h_ref[...]                                    # [T, I]   bf16 (resident)
    w2 = w2_ref[0]                                    # [I, TN]  bf16 (streamed)
    b2 = b2_ref[0].astype(jnp.float32)                # [1, TN]
    acc = jnp.dot(h, w2, preferred_element_type=jnp.float32) + b2  # [T, TN] f32
    acc = acc.astype(o_ref.dtype)
    if heads_per_tile == 1:
        o_ref[0, 0, :, :] = acc
    else:
        for p in range(heads_per_tile):               # static unroll
            o_ref[0, p, :, :] = acc[:, p * head_dim:(p + 1) * head_dim]


# ------------------------------------------------------------------ wrapper --

def _choose_heads_per_tile(num_heads, head_dim, intermediate_size,
                           itemsize=2, tile_budget_bytes=8 << 20):
    """Largest divisor of num_heads whose w2 tile fits the per-buffer budget.

    8 MiB per (double-buffered) w2 slab keeps kernel B comfortably inside the
    scoped VMEM limit on v7x while being large enough to sit near the HBM
    roofline on v5e / v6e / v7x.
    """
    for hpt in range(num_heads, 0, -1):
        if num_heads % hpt == 0:
            if intermediate_size * hpt * head_dim * itemsize <= tile_budget_bytes:
                return hpt
    return 1


def prefix_mlp_pallas(params, w1, b1, w2_tiled, b2_tiled, *, num_heads, head_dim):
    """Fused prefix MLP.

    params:   [T, H]        bf16
    w1:       [H, I]        bf16  (pre-transposed, i.e. torch W1.T)
    b1:       [I]           bf16
    w2_tiled: [NT, I, TN]   bf16  (tile t == w2[:, t*TN:(t+1)*TN])
    b2_tiled: [NT, 1, TN]   bf16
    returns   [L*2, NH, T, HD] bf16, already in the permuted consumer layout.
    """
    T, H = params.shape
    I = w1.shape[1]
    NT, I2, TN = w2_tiled.shape
    assert I2 == I and TN % head_dim == 0
    heads_per_tile = TN // head_dim
    assert num_heads % heads_per_tile == 0
    G = num_heads // heads_per_tile          # head-groups per (layer, k/v)
    LK = NT // G                             # num_layers * 2
    assert LK * G == NT
    itemsize = 2                             # bf16

    # ---- kernel A: h = tanh(params @ w1 + b1), single block ----------------
    a_bytes = (T * H + H * I + I + T * I) * itemsize
    h = pl.pallas_call(
        _mlp1_kernel,
        out_shape=jax.ShapeDtypeStruct((T, I), jnp.bfloat16),
        in_specs=[
            pl.BlockSpec((T, H), lambda: (0, 0)),
            pl.BlockSpec((H, I), lambda: (0, 0)),
            pl.BlockSpec((1, I), lambda: (0, 0)),
        ],
        out_specs=pl.BlockSpec((T, I), lambda: (0, 0)),
        compiler_params=pltpu.CompilerParams(
            vmem_limit_bytes=min(2 * a_bytes + (8 << 20), 48 << 20)),
        cost_estimate=pl.CostEstimate(
            flops=2 * T * H * I, transcendentals=T * I, bytes_accessed=a_bytes),
    )(params, w1, b1.reshape(1, I))

    # ---- kernel B: stream w2 tiles, write [L*2, NH, T, HD] directly --------
    per_step_bytes = (I * TN + TN + heads_per_tile * T * head_dim + T * I) * itemsize
    vmem_limit = min(2 * per_step_bytes + (8 << 20), 48 << 20)
    o_total = NT * TN
    kernel = functools.partial(
        _mlp2_kernel, heads_per_tile=heads_per_tile, head_dim=head_dim)

    out = pl.pallas_call(
        kernel,
        out_shape=jax.ShapeDtypeStruct((LK, num_heads, T, head_dim), jnp.bfloat16),
        grid=(LK, G),
        in_specs=[
            pl.BlockSpec((T, I), lambda j, g: (0, 0)),                 # h (resident)
            pl.BlockSpec((1, I, TN), lambda j, g: (j * G + g, 0, 0)),  # w2 tile
            pl.BlockSpec((1, 1, TN), lambda j, g: (j * G + g, 0, 0)),  # b2 tile
        ],
        out_specs=pl.BlockSpec((1, heads_per_tile, T, head_dim),
                               lambda j, g: (j, g, 0, 0)),
        compiler_params=pltpu.CompilerParams(
            dimension_semantics=("parallel", "parallel"),  # megacore split
            vmem_limit_bytes=vmem_limit),
        cost_estimate=pl.CostEstimate(
            flops=2 * T * I * o_total,
            transcendentals=0,
            bytes_accessed=(T * I + NT * I * TN + NT * TN
                            + LK * num_heads * T * head_dim) * itemsize),
    )(h, w2_tiled, b2_tiled)
    return out


# ------------------------------------------------------------------- module --

class PrefixMLPWrapperJAX:
    """JAX/Pallas port of PrefixMLPWrapper (deterministic synthetic init)."""

    def __init__(self, num_tokens, num_layers, num_heads, head_dim,
                 include_gates=False, intermediate_size=1024,
                 dtype=jnp.bfloat16, key=None, heads_per_tile=None):
        self.num_tokens = num_tokens
        self.num_layers = num_layers
        self.num_heads = num_heads
        self.head_dim = head_dim
        self.include_gates = include_gates
        hidden_dim = num_heads * head_dim
        self.hidden_dim = hidden_dim
        self.intermediate_size = intermediate_size

        if key is None:
            key = jax.random.PRNGKey(0)
        k_p, k_w1, k_b1, k_w2, k_b2 = jax.random.split(key, 5)

        # params ~ N(0, 1)  (torch.nn.init.normal_)
        self.params = jax.random.normal(k_p, (num_tokens, hidden_dim)).astype(dtype)

        # nn.Linear default init: U(-1/sqrt(fan_in), 1/sqrt(fan_in)); stored
        # pre-transposed as [in, out] so the kernel does x @ W (== torch x @ W.T).
        lim1 = 1.0 / (hidden_dim ** 0.5)
        self.w1 = jax.random.uniform(
            k_w1, (hidden_dim, intermediate_size), minval=-lim1, maxval=lim1
        ).astype(dtype)
        self.b1 = jax.random.uniform(
            k_b1, (intermediate_size,), minval=-lim1, maxval=lim1).astype(dtype)

        out_dim = num_layers * 2 * hidden_dim
        lim2 = 1.0 / (intermediate_size ** 0.5)
        self.w2 = jax.random.uniform(
            k_w2, (intermediate_size, out_dim), minval=-lim2, maxval=lim2
        ).astype(dtype)
        self.b2 = jax.random.uniform(
            k_b2, (out_dim,), minval=-lim2, maxval=lim2).astype(dtype)

        # Pre-tile w2/b2 ONCE so kernel B streams lane-dense [I, TN] slabs and
        # scatters each tile straight into its (layer, k/v, head-group) slot.
        if heads_per_tile is None:
            heads_per_tile = _choose_heads_per_tile(
                num_heads, head_dim, intermediate_size)
        assert num_heads % heads_per_tile == 0
        self.heads_per_tile = heads_per_tile
        TN = heads_per_tile * head_dim
        NT = out_dim // TN
        self.w2_tiled = self.w2.reshape(intermediate_size, NT, TN).transpose(1, 0, 2)
        self.b2_tiled = self.b2.reshape(NT, 1, TN)

        if include_gates:
            self.gates = jnp.zeros((num_layers, num_heads), dtype=dtype)

    def forward(self, batch_size, materialize_batch=True):
        # Hot path: fused 2-layer MLP, output already in [L*2, NH, T, HD].
        out = prefix_mlp_pallas(
            self.params, self.w1, self.b1, self.w2_tiled, self.b2_tiled,
            num_heads=self.num_heads, head_dim=self.head_dim)

        prefixes = []
        for layer_i in range(self.num_layers):
            key = out[2 * layer_i]          # [NH, T, HD]
            value = out[2 * layer_i + 1]    # [NH, T, HD]
            if materialize_batch:
                # Matches torch .expand(batch_size, ...). Consumers that
                # broadcast over batch implicitly should pass
                # materialize_batch=False to avoid B real copies of K/V in HBM.
                key = jnp.broadcast_to(
                    key[None], (batch_size, self.num_heads,
                                self.num_tokens, self.head_dim))
                value = jnp.broadcast_to(
                    value[None], (batch_size, self.num_heads,
                                  self.num_tokens, self.head_dim))
            layer_prefix = {"key": key, "value": value}
            if self.include_gates:
                layer_prefix["gate"] = self.gates[layer_i]
            prefixes.append(layer_prefix)
        return prefixes


# -------------------------------------------------------------------- check --

def _reference(module):
    """Pure-JAX reference, returns [L, 2, NH, T, HD] bf16."""
    x = module.params.astype(jnp.float32)
    hmat = jnp.tanh(x @ module.w1.astype(jnp.float32)
                    + module.b1.astype(jnp.float32))
    hmat = hmat.astype(jnp.bfloat16).astype(jnp.float32)
    flat = hmat @ module.w2.astype(jnp.float32) + module.b2.astype(jnp.float32)
    flat = flat.astype(jnp.bfloat16)
    T, L = module.num_tokens, module.num_layers
    NH, HD = module.num_heads, module.head_dim
    return flat.reshape(T, L, 2, NH, HD).transpose(1, 2, 3, 0, 4)


if __name__ == "__main__":
    # Small shapes consistent with the module.
    num_tokens = 8
    num_layers = 2
    num_heads = 4
    head_dim = 8          # hidden_dim = 32
    intermediate = 32
    batch_size = 2

    module = PrefixMLPWrapperJAX(
        num_tokens, num_layers, num_heads, head_dim,
        include_gates=True, intermediate_size=intermediate,
        key=jax.random.PRNGKey(0))

    prefixes = jax.block_until_ready(module.forward(batch_size))

    assert len(prefixes) == num_layers
    for p in prefixes:
        assert p["key"].shape == (batch_size, num_heads, num_tokens, head_dim)
        assert p["value"].shape == (batch_size, num_heads, num_tokens, head_dim)
        assert p["key"].dtype == jnp.bfloat16
        assert p["gate"].shape == (num_heads,)

    # Cross-check the Pallas MLP (direct-layout output) against pure JAX.
    ref = _reference(module)                                   # [L,2,NH,T,HD]
    got = prefix_mlp_pallas(module.params, module.w1, module.b1,
                            module.w2_tiled, module.b2_tiled,
                            num_heads=num_heads, head_dim=head_dim)
    got5 = got.reshape(num_layers, 2, num_heads, num_tokens, head_dim)
    assert jnp.allclose(got5.astype(jnp.float32), ref.astype(jnp.float32),
                        atol=2e-2, rtol=2e-2)
    for layer_i in range(num_layers):
        assert jnp.allclose(prefixes[layer_i]["key"][0].astype(jnp.float32),
                            ref[layer_i, 0].astype(jnp.float32),
                            atol=2e-2, rtol=2e-2)
        assert jnp.allclose(prefixes[layer_i]["value"][0].astype(jnp.float32),
                            ref[layer_i, 1].astype(jnp.float32),
                            atol=2e-2, rtol=2e-2)

    # Also exercise the multi-tile-per-(layer, k/v) path (G > 1 grid axis).
    module2 = PrefixMLPWrapperJAX(
        num_tokens, num_layers, num_heads, head_dim,
        include_gates=False, intermediate_size=intermediate,
        key=jax.random.PRNGKey(0), heads_per_tile=2)
    got2 = prefix_mlp_pallas(module2.params, module2.w1, module2.b1,
                             module2.w2_tiled, module2.b2_tiled,
                             num_heads=num_heads, head_dim=head_dim)
    ref2 = _reference(module2)
    got2_5 = got2.reshape(num_layers, 2, num_heads, num_tokens, head_dim)
    assert jnp.allclose(got2_5.astype(jnp.float32), ref2.astype(jnp.float32),
                        atol=2e-2, rtol=2e-2)

    jax.block_until_ready((got, got2))
    print("KERNEL_OK")
</pallas_src>

<mosaic_0001>
module attributes {stable_mosaic.version = 11 : i64} {
  func.func @_mlp1_kernel(%arg0: memref<8x32xbf16, #tpu.memory_space<vmem>>, %arg1: memref<32x32xbf16, #tpu.memory_space<vmem>>, %arg2: memref<1x32xbf16, #tpu.memory_space<vmem>>, %arg3: memref<8x32xbf16, #tpu.memory_space<vmem>>) attributes {dimension_semantics = [], scalar_prefetch = 0 : i64, scratch_operands = 0 : i64, tpu.core_type = #tpu.core_type<tc>} {
    %c0 = arith.constant 0 : index
    %c0_0 = arith.constant 0 : index
    %0 = vector.load %arg0[%c0, %c0_0] : memref<8x32xbf16, #tpu.memory_space<vmem>>, vector<8x32xbf16>
    %c0_1 = arith.constant 0 : index
    %c0_2 = arith.constant 0 : index
    %1 = vector.load %arg1[%c0_1, %c0_2] : memref<32x32xbf16, #tpu.memory_space<vmem>>, vector<32x32xbf16>
    %c0_3 = arith.constant 0 : index
    %c0_4 = arith.constant 0 : index
    %2 = vector.load %arg2[%c0_3, %c0_4] : memref<1x32xbf16, #tpu.memory_space<vmem>>, vector<1x32xbf16>
    %3 = arith.extf %2 : vector<1x32xbf16> to vector<1x32xf32>
    %cst = arith.constant dense<0.000000e+00> : vector<8x32xf32>
    %4 = tpu.matmul %0, %1, %cst {dimension_numbers = #tpu.dot_dimension_numbers<[1], [0], [0], [1], [0, 0, 1, 1], [], []>} : vector<8x32xbf16>, vector<32x32xbf16>, vector<8x32xf32> -> vector<8x32xf32>
    %5 = vector.broadcast %3 : vector<1x32xf32> to vector<8x32xf32>
    %6 = arith.addf %4, %5 : vector<8x32xf32>
    %7 = math.tanh %6 : vector<8x32xf32>
    %8 = arith.truncf %7 : vector<8x32xf32> to vector<8x32xbf16>
    %c0_5 = arith.constant 0 : index
    %c0_6 = arith.constant 0 : index
    %9 = vector.load %arg3[%c0_5, %c0_6] : memref<8x32xbf16, #tpu.memory_space<vmem>>, vector<8x32xbf16>
    tpu.vector_store %arg3[%c0_5, %c0_6], %8 {strides = array<i32>} : memref<8x32xbf16, #tpu.memory_space<vmem>>, vector<8x32xbf16>,
    return
  }
}

</mosaic_0001>

<llo_original>
// kernel: tpu_custom_call.1
$region0: #{tpu_custom_call.1}
  #allocation0 [shape = 'u32[]', space=smem, size = 0x4, offset = 0x4, fixed_abs, tag = 'smem constant byte address 0x4 - core index']
  #allocation1 [shape = 'u32[144,128]{1,0:T(1,128)}', space=vmem, size = 0x12000, scoped, tag = 'internal scratch']
  %s0 = inlined_call_operand.hbm [shape: bf16[8,32], index: 0, kind: input, shape index: {}]
  %s1 = inlined_call_operand.hbm [shape: bf16[32,32], index: 1, kind: input, shape index: {}]
  %s2 = inlined_call_operand.vmem [shape: bf16[1,32], index: 2, kind: input, shape index: {}]
  %s3 = inlined_call_operand.hbm [shape: bf16[8,32], index: 3, kind: output, shape index: {}]
  %s4 = sld [smem:[#allocation0]]
  $region30: #{tpu_custom_call.1} parent=0
    _
  %s6 = ssub.s32 1, %s4
  %s7 = scalar_select 0, %s6, %s4
  $region1: #{tpu_custom_call.1} parent=0
    #allocation2 [shape = 'u8[2048]{0}', space=vmem, size = 0x800, scoped, tag = 'input window, operand 0, single buffered']
    #allocation3 [shape = 's32[1]{0}', space=sflag, size = 0x4, scoped, tag = 'scoped memory for tpu_custom_call.1']
    #allocation4 [shape = 's32[1]{0}', space=sflag, size = 0x4, scoped, tag = 'scoped memory for tpu_custom_call.1']
    #allocation5 [shape = 'u8[8192]{0}', space=vmem, size = 0x2000, scoped, tag = 'input window, operand 1, single buffered']
    #allocation6 [shape = 's32[1]{0}', space=sflag, size = 0x4, scoped, tag = 'scoped memory for tpu_custom_call.1']
    #allocation7 [shape = 'u8[2048]{0}', space=vmem, size = 0x800, scoped, tag = 'output window, operand 0, single buffered']
    %8 = vsyncpa [#allocation3], 0
    %9 = vsyncpa [#allocation6], 0
    %10 = vsyncpa [#allocation4], 0
    // Predicated region
    $region2: #{tpu_custom_call.1} parent=1 // pred_check
      _
    $region3: #{tpu_custom_call.1} parent=1 // pred_check_branch
      %12 = sbr.rel (0) target = $region5
    $region4: #{tpu_custom_call.1} parent=1 // pred_region
      %s14 = ssub.s32 64, 64
      %15 = vsyncadd [#allocation3], %s14
      %s17 = sshll.u32 [#allocation2], 4
      %s18 = int_to_ptr.vmem [resolvable:$true] %s17
      %20 = dma.hbm_to_vmem [thread:$0]  %s0, 64, %s18, [#allocation3]
    $region5: #{tpu_custom_call.1} parent=1 // pred_fallthru
      _
    // Predicated region
    $region6: #{tpu_custom_call.1} parent=1 // pred_check
      _
    $region7: #{tpu_custom_call.1} parent=1 // pred_check_branch
      %22 = sbr.rel (0) target = $region9
    $region8: #{tpu_custom_call.1} parent=1 // pred_region
      %s24 = ssub.s32 256, 256
      %25 = vsyncadd [#allocation6], %s24
      %s26 = sshll.u32 [#allocation5], 4
      %s27 = int_to_ptr.vmem [resolvable:$true] %s26
      %32 = dma.hbm_to_vmem [thread:$0]  %s1, 256, %s27, [#allocation6], 64, 64, 4
    $region9: #{tpu_custom_call.1} parent=1 // pred_fallthru
      _
    // Predicated region
    $region10: #{tpu_custom_call.1} parent=1 // pred_check
      _
    $region11: #{tpu_custom_call.1} parent=1 // pred_check_branch
      %34 = sbr.rel (0) target = $region13
    $region12: #{tpu_custom_call.1} parent=1 // pred_region
      _
    $region13: #{tpu_custom_call.1} parent=1 // pred_fallthru
      _
    // Predicated region
    $region14: #{tpu_custom_call.1} parent=1 // pred_check
      _
    $region15: #{tpu_custom_call.1} parent=1 // pred_check_branch
      %36 = sbr.rel (0) target = $region17
    $region16: #{tpu_custom_call.1} parent=1 // pred_region
      %37 = dma.done [#allocation3], 64
    $region17: #{tpu_custom_call.1} parent=1 // pred_fallthru
      _
    // Predicated region
    $region18: #{tpu_custom_call.1} parent=1 // pred_check
      _
    $region19: #{tpu_custom_call.1} parent=1 // pred_check_branch
      %39 = sbr.rel (0) target = $region21
    $region20: #{tpu_custom_call.1} parent=1 // pred_region
      %40 = dma.done [#allocation6], 256
    $region21: #{tpu_custom_call.1} parent=1 // pred_fallthru
      _
    %v42 = vld [vmem:[#allocation2] sm:$0xf]
    %v43 = vld [vmem:[#allocation5] sm:$0xf]
    %v44 = vld [vmem:[#allocation5 + $0x4] sm:$0xf]
    %v45 = vld [vmem:[#allocation5 + $0x8] sm:$0xf]
    %v46 = vld [vmem:[#allocation5 + $0xc] sm:$0xf]
    %v47 = vld [vmem:[%s2] sm:$0x1]
    %v48 = vunpack.c.l.bf16 %v47
    %v49 = vlaneseq
    %v50 = vshrl.u32 %v49, 7
    %v51 = vsub.s32 0, %v50
    %v52 = vrot.slane %v48, %v51
    %v57 = vunpack.c.l.b16 %v43
    %v58 = vunpack.c.l.b16 %v44
    %v59 = vunpack.c.l.b16 %v45
    %v60 = vunpack.c.l.b16 %v46
    %v61 = vpack.c.b16 %v58, %v57
    %v62 = vpack.c.b16 %v60, %v59
    %vm65 = vcmask 261120
    %v67 = vsel %vm65, %v42, 0
    %69 = vmatprep.subr.bf16.mxu0 0
    %70 = vmatpush1.bf16.msra.mxu0 %v61
    %71 = vmatprep.subr.bf16.mxu0 0
    %72 = vmatpush1.bf16.msra.mxu0 %v62
    %73 = vmatprep.subr.bf16.mxu0 0
    %74 = vmatpush1.bf16.msra.mxu0 0
    %75 = vmatprep.subr.bf16.mxu0 0
    %76 = vmatpush1.bf16.msra.mxu0 0
    %77 = vmatprep.subr.bf16.mxu0 0
    %78 = vmatpush1.bf16.msra.mxu0 0
    %79 = vmatprep.subr.bf16.mxu0 0
    %80 = vmatpush1.bf16.msra.mxu0 0
    %81 = vmatprep.subr.bf16.mxu0 0
    %82 = vmatpush1.bf16.msra.mxu0 0
    %83 = vmatprep.subr.bf16.mxu0 0
    %84 = vmatpush1.bf16.msra.mxu0 0
    %85 = vmatprep.subr.bf16.mxu0 0
    %86 = vmatpush1.bf16.msra.mxu0 0
    %87 = vmatprep.subr.bf16.mxu0 0
    %88 = vmatpush1.bf16.msra.mxu0 0
    %89 = vmatprep.subr.bf16.mxu0 0
    %90 = vmatpush1.bf16.msra.mxu0 0
    %91 = vmatprep.subr.bf16.mxu0 0
    %92 = vmatpush1.bf16.msra.mxu0 0
    %93 = vmatprep.subr.bf16.mxu0 0
    %94 = vmatpush1.bf16.msra.mxu0 0
    %95 = vmatprep.subr.bf16.mxu0 0
    %96 = vmatpush1.bf16.msra.mxu0 0
    %97 = vmatprep.subr.bf16.mxu0 0
    %98 = vmatpush1.bf16.msra.mxu0 0
    %99 = vmatprep.subr.bf16.mxu0 0
    %100 = vmatpush1.bf16.msra.mxu0 0
    %101 = vmatprep.mubr.bf16.mxu0 0
    %102 = vmatmul.mubr.bf16.gmra.mrb[0].mxu0 %v67
    %v103 = vpop.f32.mrb[0].mxu0
    %v104 = vadd.f32 %v52, %v103
    %v105 = vpop.f32.mrb[0].mxu0
    %v106 = vpop.f32.mrb[0].mxu0
    %v107 = vpop.f32.mrb[0].mxu0
    %108 = vdwg.mxu0
    %v109 = vtanh.pop %v104
    %v110 = vpack.c.bf16 %v109, %v109
    %vm111 = vcmask 257024
    %112 = vst.msk [vmem:[#allocation7] sm:$0xf] %vm111, %v110
    // Predicated region
    $region22: #{tpu_custom_call.1} parent=1 // pred_check
      _
    $region23: #{tpu_custom_call.1} parent=1 // pred_check_branch
      %114 = sbr.rel (0) target = $region25
    $region24: #{tpu_custom_call.1} parent=1 // pred_region
      %s116 = ssub.s32 64, 64
      %117 = vsyncadd [#allocation4], %s116
      %s119 = sshll.u32 [#allocation7], 4
      %s120 = int_to_ptr.vmem [resolvable:$true] %s119
      %122 = dma.vmem_to_hbm [thread:$0]  %s120, 64, %s3, [#allocation4]
    $region25: #{tpu_custom_call.1} parent=1 // pred_fallthru
      _
    // Predicated region
    $region26: #{tpu_custom_call.1} parent=1 // pred_check
      _
    $region27: #{tpu_custom_call.1} parent=1 // pred_check_branch
      %124 = sbr.rel (0) target = $region29
    $region28: #{tpu_custom_call.1} parent=1 // pred_region
      %125 = dma.done [#allocation4], 64
    $region29: #{tpu_custom_call.1} parent=1 // pred_fallthru
      _
    %126 = vsyncpa [#allocation3], 1
    %127 = vsyncpa [#allocation6], 1
    %128 = vsyncpa [#allocation4], 1

</llo_original>
